<compile_context>
chip_gen: v5e
topology: v5e:2x2
jax: 0.10.0
libtpu: 0.0.40
codegen_flags: <defaults>
</compile_context>

<pallas_src>
import functools

import jax
import jax.numpy as jnp
from jax.experimental import pallas as pl
from jax.experimental.pallas import tpu as pltpu


def _make_stats_kernel(n_classes: int, apply_softmax: bool, tile_hw: int,
                       ragged: bool, tail_valid: int, compute_dtype):
    """Per-tile channel softmax + per-class streaming reductions.

    For every class i, accumulates over the flattened spatial axis:
      dot_i = sum(s_i * 1[t == i]),  ss_i = sum(s_i^2),  tt_i = sum(1[t == i])
    into (C, 1) f32 VMEM scratch; the (1, 1, C, 3) HBM output block is written
    once per (batch, split) at the last reduction step.
    """

    def kernel(x_ref, t_ref, out_ref, dot_acc, ss_acc, tt_acc):
        @pl.when(pl.program_id(2) == 0)
        def _init():
            dot_acc[...] = jnp.zeros_like(dot_acc)
            ss_acc[...] = jnp.zeros_like(ss_acc)
            tt_acc[...] = jnp.zeros_like(tt_acc)

        # Per-tile cast in VMEM: HBM traffic stays in the caller's dtypes
        # (bf16 logits / narrow labels friendly).
        x = x_ref[0].astype(compute_dtype)        # (C, TN)
        t = t_ref[0].astype(jnp.int32)            # (1, TN)

        if apply_softmax:
            # softmax over the class (sublane) axis == dim=1 of NCHW
            m = jnp.max(x, axis=0, keepdims=True)
            e = jnp.exp(x - m)
            denom = jnp.sum(e, axis=0, keepdims=True)
            # Exact reciprocal of the (1, TN) denominator row; the (C, TN)
            # multiply dominates, so accuracy here is essentially free.
            s = e * (1.0 / denom)
        else:
            s = x

        # (C, 1) iota broadcast against (1, TN) labels — no tile-sized
        # class-index buffer.
        cls_idx = jax.lax.broadcasted_iota(jnp.int32, (n_classes, 1), 0)

        def accumulate(s_v, t_v):
            match = t_v == cls_idx                               # (C, TN)
            sf = s_v.astype(jnp.float32)                         # f32 accumulation
            dot_acc[...] += jnp.sum(jnp.where(match, sf, 0.0), axis=1,
                                    keepdims=True)
            ss_acc[...] += jnp.sum(sf * sf, axis=1, keepdims=True)
            tt_acc[...] += jnp.sum(jnp.where(match, 1.0, 0.0), axis=1,
                                   keepdims=True)

        if ragged:
            # Only the globally-last tile needs masking; keep it off the hot
            # path for every other tile.
            is_tail = jnp.logical_and(
                pl.program_id(1) == pl.num_programs(1) - 1,
                pl.program_id(2) == pl.num_programs(2) - 1)

            @pl.when(jnp.logical_not(is_tail))
            def _full_tile():
                accumulate(s, t)

            @pl.when(is_tail)
            def _tail_tile():
                col = jax.lax.broadcasted_iota(jnp.int32, (1, tile_hw), 1)
                valid = col < tail_valid
                # Mask s (not just t): out-of-range columns hold readable
                # garbage that could be NaN/Inf and would poison ss.
                s_m = jnp.where(valid, s, 0.0)
                t_m = jnp.where(valid, t, -1)        # never matches a class
                accumulate(s_m, t_m)
        else:
            accumulate(s, t)

        @pl.when(pl.program_id(2) == pl.num_programs(2) - 1)
        def _finalize():
            out_ref[0, 0, :, 0:1] = dot_acc[...]
            out_ref[0, 0, :, 1:2] = ss_acc[...]
            out_ref[0, 0, :, 2:3] = tt_acc[...]

    return kernel


@functools.partial(jax.jit, static_argnames=("n_classes", "apply_softmax",
                                             "tile_hw", "compute_dtype"))
def tvmf_dice_loss(inputs, target, kappa, *, n_classes, apply_softmax=True,
                   tile_hw=None, compute_dtype=None):
    """inputs: (B, C, H, W) logits (f32 or bf16). target: (B, H, W) int labels."""
    B, C, H, W = inputs.shape
    assert C == n_classes
    hw = H * W

    cdt = jnp.float32 if compute_dtype is None else compute_dtype

    # Free reshapes only — no transpose, no pad, no wrapper dtype casts.
    x = inputs.reshape(B, C, hw)
    t = target.reshape(B, 1, hw)

    # Generation-aware sizing: bigger slabs on big-VMEM chips, scoped-VMEM
    # limit raised well above the default but kept inside physical VMEM.
    vmem_cap = 64 * 1024 * 1024          # conservative fallback (v7x-sized)
    try:
        vmem_cap = int(getattr(pltpu.get_tpu_info(), "vmem_capacity_bytes",
                               vmem_cap))
    except Exception:
        pass
    vmem_limit = max(32 * 1024 * 1024,
                     min(int(0.75 * vmem_cap), 96 * 1024 * 1024))

    if tile_hw is None:
        # ~6 MiB f32 (C, tile) slab on 128 MiB-VMEM chips (v5e/v6e), ~4 MiB on
        # 64 MiB-VMEM chips (v7x): amortizes the ~0.35 us per-grid-step cost.
        slab_bytes = (6 * 1024 * 1024 if vmem_cap >= 100 * 1024 * 1024
                      else 4 * 1024 * 1024)
        tile_hw = max(128, ((slab_bytes // 4) // C) // 128 * 128)

    if tile_hw >= hw:
        tile_hw = hw            # full axis in one block (always layout-legal)
        ragged = False
    else:
        tile_hw = max(128, (tile_hw // 128) * 128)
        ragged = (hw % tile_hw) != 0
    n_tiles = pl.cdiv(hw, tile_hw)
    tail_valid = hw - (n_tiles - 1) * tile_hw

    # For tiny batches, split the hw reduction in two so both v7x TensorCores
    # get parallel grid work (partials are summed in the wrapper).
    n_splits = 2 if (B == 1 and n_tiles >= 2 and n_tiles % 2 == 0) else 1
    tiles_per_split = n_tiles // n_splits

    stats = pl.pallas_call(
        _make_stats_kernel(C, apply_softmax, tile_hw, ragged, tail_valid, cdt),
        out_shape=jax.ShapeDtypeStruct((B, n_splits, C, 3), jnp.float32),
        grid_spec=pltpu.PrefetchScalarGridSpec(
            num_scalar_prefetch=0,
            grid=(B, n_splits, tiles_per_split),
            in_specs=[
                pl.BlockSpec((1, C, tile_hw),
                             lambda b, s, n: (b, 0, s * tiles_per_split + n)),
                pl.BlockSpec((1, 1, tile_hw),
                             lambda b, s, n: (b, 0, s * tiles_per_split + n)),
            ],
            out_specs=pl.BlockSpec((1, 1, C, 3), lambda b, s, n: (b, s, 0, 0)),
            scratch_shapes=[
                pltpu.VMEM((C, 1), jnp.float32),   # dot accumulator
                pltpu.VMEM((C, 1), jnp.float32),   # sum(s^2) accumulator
                pltpu.VMEM((C, 1), jnp.float32),   # per-class pixel count
            ],
        ),
        compiler_params=pltpu.CompilerParams(
            dimension_semantics=("parallel", "parallel", "arbitrary"),
            vmem_limit_bytes=vmem_limit,
        ),
    )(x, t)

    # Combine per-(batch, split) partials, then the tiny scalar epilogue.
    totals = jnp.sum(stats, axis=(0, 1))          # (C, 3)
    dot, ss, tt = totals[:, 0], totals[:, 1], totals[:, 2]

    # F.normalize(p=2, dim=[0,1,2], eps=1e-12) over each full (B,H,W) tensor
    # -> cosine between the normalized prediction and the one-hot target.
    eps = 1e-12
    cosine = dot / (jnp.maximum(jnp.sqrt(ss), eps) * jnp.maximum(jnp.sqrt(tt), eps))
    intersect = (1.0 + cosine) / (1.0 + (1.0 - cosine) * kappa) - 1.0
    per_class_loss = (1.0 - intersect) ** 2.0
    return jnp.sum(per_class_loss) / n_classes


def _reference_loss(inputs, target, kappa, n_classes):
    """Pure-JAX reference mirroring the PyTorch module."""
    s = jax.nn.softmax(inputs.astype(jnp.float32), axis=1)
    t = jax.nn.one_hot(target, n_classes, axis=1, dtype=jnp.float32)
    eps = 1e-12
    loss = 0.0
    for i in range(n_classes):
        si = s[:, i]
        ti = t[:, i]
        sn = si / jnp.maximum(jnp.sqrt(jnp.sum(si * si)), eps)
        tn = ti / jnp.maximum(jnp.sqrt(jnp.sum(ti * ti)), eps)
        cosine = jnp.sum(sn * tn)
        intersect = (1.0 + cosine) / (1.0 + (1.0 - cosine) * kappa) - 1.0
        loss = loss + (1.0 - intersect) ** 2.0
    return loss / n_classes


if __name__ == "__main__":
    kappa = 2.0  # the module takes kappa at construction time

    key = jax.random.PRNGKey(0)
    k1, k2, k3, k4, k5, k6 = jax.random.split(key, 6)

    # Test 1: single-tile path (shapes implied by the module).
    B, C, H, W = 2, 4, 16, 16
    inputs = jax.random.normal(k1, (B, C, H, W), dtype=jnp.float32)
    target = jax.random.randint(k2, (B, H, W), 0, C, dtype=jnp.int32)
    loss = jax.block_until_ready(tvmf_dice_loss(inputs, target, kappa, n_classes=C))
    ref = jax.block_until_ready(_reference_loss(inputs, target, kappa, C))
    assert jnp.allclose(loss, ref, rtol=1e-4, atol=1e-5), (loss, ref)

    # Test 2: multi-tile reduction with a ragged (masked) last tile.
    B2, C2, H2, W2 = 2, 4, 12, 12            # hw = 144, tile_hw = 128
    inputs2 = jax.random.normal(k3, (B2, C2, H2, W2), dtype=jnp.float32)
    target2 = jax.random.randint(k4, (B2, H2, W2), 0, C2, dtype=jnp.int32)
    loss2 = jax.block_until_ready(
        tvmf_dice_loss(inputs2, target2, kappa, n_classes=C2, tile_hw=128))
    ref2 = jax.block_until_ready(_reference_loss(inputs2, target2, kappa, C2))
    assert jnp.allclose(loss2, ref2, rtol=1e-4, atol=1e-5), (loss2, ref2)

    # Test 3: B == 1 -> hw reduction split across two parallel grid entries.
    B3, C3, H3, W3 = 1, 4, 32, 32            # hw = 1024 -> 4 tiles of 256 -> 2 splits
    inputs3 = jax.random.normal(k5, (B3, C3, H3, W3), dtype=jnp.float32)
    target3 = jax.random.randint(k6, (B3, H3, W3), 0, C3, dtype=jnp.int32)
    loss3 = jax.block_until_ready(
        tvmf_dice_loss(inputs3, target3, kappa, n_classes=C3, tile_hw=256))
    ref3 = jax.block_until_ready(_reference_loss(inputs3, target3, kappa, C3))
    assert jnp.allclose(loss3, ref3, rtol=1e-4, atol=1e-5), (loss3, ref3)

    # Test 4: bf16 logits streamed from HBM, upcast per tile inside the kernel.
    inputs_bf16 = inputs.astype(jnp.bfloat16)
    loss4 = jax.block_until_ready(
        tvmf_dice_loss(inputs_bf16, target, kappa, n_classes=C))
    ref4 = jax.block_until_ready(_reference_loss(inputs_bf16, target, kappa, C))
    assert jnp.allclose(loss4, ref4, rtol=1e-3, atol=1e-4), (loss4, ref4)

    print("KERNEL_OK")
</pallas_src>

<mosaic_0001>
module attributes {stable_mosaic.version = 11 : i64} {
  func.func @kernel(%arg0: i32, %arg1: i32, %arg2: i32, %arg3: memref<1x4x256xf32, #tpu.memory_space<vmem>>, %arg4: memref<1x1x256xi32, #tpu.memory_space<vmem>>, %arg5: memref<1x1x4x3xf32, #tpu.memory_space<vmem>>, %arg6: memref<4x1xf32, #tpu.memory_space<vmem>>, %arg7: memref<4x1xf32, #tpu.memory_space<vmem>>, %arg8: memref<4x1xf32, #tpu.memory_space<vmem>>) attributes {dimension_semantics = [#tpu.dimension_semantics<parallel>, #tpu.dimension_semantics<parallel>, #tpu.dimension_semantics<arbitrary>], iteration_bounds = array<i64: 2, 1, 1>, scalar_prefetch = 0 : i64, scratch_operands = 3 : i64, tpu.core_type = #tpu.core_type<tc>, window_params = [{transform_indices = @transform_0, window_bounds = array<i64: 1, 4, 256>}, {transform_indices = @transform_1, window_bounds = array<i64: 1, 1, 256>}, {transform_indices = @transform_2, window_bounds = array<i64: 1, 1, 4, 3>}]} {
    %c0_i32 = arith.constant 0 : i32
    %0 = arith.cmpi eq, %arg2, %c0_i32 : i32
    %1 = arith.extui %0 : i1 to i32
    %c0_i32_0 = arith.constant 0 : i32
    %2 = arith.cmpi ne, %1, %c0_i32_0 : i32
    scf.if %2 {
      %cst_28 = arith.constant 0.000000e+00 : f32
      %46 = vector.broadcast %cst_28 : f32 to vector<4x1xf32>
      %c0_29 = arith.constant 0 : index
      %c0_30 = arith.constant 0 : index
      %47 = vector.load %arg6[%c0_29, %c0_30] : memref<4x1xf32, #tpu.memory_space<vmem>>, vector<4x1xf32>
      tpu.vector_store %arg6[%c0_29, %c0_30], %46 {strides = array<i32>} : memref<4x1xf32, #tpu.memory_space<vmem>>, vector<4x1xf32>,
      %cst_31 = arith.constant 0.000000e+00 : f32
      %48 = vector.broadcast %cst_31 : f32 to vector<4x1xf32>
      %c0_32 = arith.constant 0 : index
      %c0_33 = arith.constant 0 : index
      %49 = vector.load %arg7[%c0_32, %c0_33] : memref<4x1xf32, #tpu.memory_space<vmem>>, vector<4x1xf32>
      tpu.vector_store %arg7[%c0_32, %c0_33], %48 {strides = array<i32>} : memref<4x1xf32, #tpu.memory_space<vmem>>, vector<4x1xf32>,
      %cst_34 = arith.constant 0.000000e+00 : f32
      %50 = vector.broadcast %cst_34 : f32 to vector<4x1xf32>
      %c0_35 = arith.constant 0 : index
      %c0_36 = arith.constant 0 : index
      %51 = vector.load %arg8[%c0_35, %c0_36] : memref<4x1xf32, #tpu.memory_space<vmem>>, vector<4x1xf32>
      tpu.vector_store %arg8[%c0_35, %c0_36], %50 {strides = array<i32>} : memref<4x1xf32, #tpu.memory_space<vmem>>, vector<4x1xf32>,
    } else {
    }
    %c0 = arith.constant 0 : index
    %c0_1 = arith.constant 0 : index
    %c0_2 = arith.constant 0 : index
    %3 = vector.load %arg3[%c0, %c0_1, %c0_2] : memref<1x4x256xf32, #tpu.memory_space<vmem>>, vector<1x4x256xf32>
    %4 = vector.shape_cast %3 : vector<1x4x256xf32> to vector<4x256xf32>
    %c0_3 = arith.constant 0 : index
    %c0_4 = arith.constant 0 : index
    %c0_5 = arith.constant 0 : index
    %5 = vector.load %arg4[%c0_3, %c0_4, %c0_5] : memref<1x1x256xi32, #tpu.memory_space<vmem>>, vector<1x1x256xi32>
    %6 = vector.shape_cast %5 : vector<1x1x256xi32> to vector<1x256xi32>
    %cst = arith.constant dense<0xFF800000> : vector<256xf32>
    %7 = vector.multi_reduction <maximumf>, %4, %cst [0] : vector<4x256xf32> to vector<256xf32>
    %8 = vector.shape_cast %7 : vector<256xf32> to vector<1x256xf32>
    %9 = vector.broadcast %8 : vector<1x256xf32> to vector<4x256xf32>
    %10 = arith.subf %4, %9 : vector<4x256xf32>
    %11 = math.exp %10 : vector<4x256xf32>
    %cst_6 = arith.constant dense<0.000000e+00> : vector<256xf32>
    %12 = vector.multi_reduction <add>, %11, %cst_6 [0] : vector<4x256xf32> to vector<256xf32>
    %13 = vector.shape_cast %12 : vector<256xf32> to vector<1x256xf32>
    %cst_7 = arith.constant 1.000000e+00 : f32
    %14 = vector.broadcast %cst_7 : f32 to vector<1x256xf32>
    %15 = arith.divf %14, %13 : vector<1x256xf32>
    %16 = vector.broadcast %15 : vector<1x256xf32> to vector<4x256xf32>
    %17 = arith.mulf %11, %16 : vector<4x256xf32>
    %18 = tpu.iota {dimensions = array<i32: 0>} : vector<4x1xi32>
    %19 = vector.broadcast %6 : vector<1x256xi32> to vector<4x256xi32>
    %20 = vector.broadcast %18 : vector<4x1xi32> to vector<4x256xi32>
    %21 = arith.cmpi eq, %19, %20 : vector<4x256xi32>
    %c0_8 = arith.constant 0 : index
    %c0_9 = arith.constant 0 : index
    %22 = vector.load %arg6[%c0_8, %c0_9] : memref<4x1xf32, #tpu.memory_space<vmem>>, vector<4x1xf32>
    %cst_10 = arith.constant 0.000000e+00 : f32
    %23 = vector.broadcast %cst_10 : f32 to vector<4x256xf32>
    %24 = arith.select %21, %17, %23 : vector<4x256xi1>, vector<4x256xf32>
    %cst_11 = arith.constant dense<0.000000e+00> : vector<4xf32>
    %25 = vector.multi_reduction <add>, %24, %cst_11 [1] : vector<4x256xf32> to vector<4xf32>
    %26 = vector.shape_cast %25 : vector<4xf32> to vector<4x1xf32>
    %27 = arith.addf %22, %26 : vector<4x1xf32>
    %c0_12 = arith.constant 0 : index
    %c0_13 = arith.constant 0 : index
    %28 = vector.load %arg6[%c0_12, %c0_13] : memref<4x1xf32, #tpu.memory_space<vmem>>, vector<4x1xf32>
    tpu.vector_store %arg6[%c0_12, %c0_13], %27 {strides = array<i32>} : memref<4x1xf32, #tpu.memory_space<vmem>>, vector<4x1xf32>,
    %c0_14 = arith.constant 0 : index
    %c0_15 = arith.constant 0 : index
    %29 = vector.load %arg7[%c0_14, %c0_15] : memref<4x1xf32, #tpu.memory_space<vmem>>, vector<4x1xf32>
    %30 = arith.mulf %17, %17 : vector<4x256xf32>
    %cst_16 = arith.constant dense<0.000000e+00> : vector<4xf32>
    %31 = vector.multi_reduction <add>, %30, %cst_16 [1] : vector<4x256xf32> to vector<4xf32>
    %32 = vector.shape_cast %31 : vector<4xf32> to vector<4x1xf32>
    %33 = arith.addf %29, %32 : vector<4x1xf32>
    %c0_17 = arith.constant 0 : index
    %c0_18 = arith.constant 0 : index
    %34 = vector.load %arg7[%c0_17, %c0_18] : memref<4x1xf32, #tpu.memory_space<vmem>>, vector<4x1xf32>
    tpu.vector_store %arg7[%c0_17, %c0_18], %33 {strides = array<i32>} : memref<4x1xf32, #tpu.memory_space<vmem>>, vector<4x1xf32>,
    %c0_19 = arith.constant 0 : index
    %c0_20 = arith.constant 0 : index
    %35 = vector.load %arg8[%c0_19, %c0_20] : memref<4x1xf32, #tpu.memory_space<vmem>>, vector<4x1xf32>
    %cst_21 = arith.constant 1.000000e+00 : f32
    %cst_22 = arith.constant 0.000000e+00 : f32
    %36 = vector.broadcast %cst_21 : f32 to vector<4x256xf32>
    %37 = vector.broadcast %cst_22 : f32 to vector<4x256xf32>
    %38 = arith.select %21, %36, %37 : vector<4x256xi1>, vector<4x256xf32>
    %cst_23 = arith.constant dense<0.000000e+00> : vector<4xf32>
    %39 = vector.multi_reduction <add>, %38, %cst_23 [1] : vector<4x256xf32> to vector<4xf32>
    %40 = vector.shape_cast %39 : vector<4xf32> to vector<4x1xf32>
    %41 = arith.addf %35, %40 : vector<4x1xf32>
    %c0_24 = arith.constant 0 : index
    %c0_25 = arith.constant 0 : index
    %42 = vector.load %arg8[%c0_24, %c0_25] : memref<4x1xf32, #tpu.memory_space<vmem>>, vector<4x1xf32>
    tpu.vector_store %arg8[%c0_24, %c0_25], %41 {strides = array<i32>} : memref<4x1xf32, #tpu.memory_space<vmem>>, vector<4x1xf32>,
    %c0_i32_26 = arith.constant 0 : i32
    %43 = arith.cmpi eq, %arg2, %c0_i32_26 : i32
    %44 = arith.extui %43 : i1 to i32
    %c0_i32_27 = arith.constant 0 : i32
    %45 = arith.cmpi ne, %44, %c0_i32_27 : i32
    scf.if %45 {
      %c0_28 = arith.constant 0 : index
      %c0_29 = arith.constant 0 : index
      %46 = vector.load %arg6[%c0_28, %c0_29] : memref<4x1xf32, #tpu.memory_space<vmem>>, vector<4x1xf32>
      %c0_30 = arith.constant 0 : index
      %c0_31 = arith.constant 0 : index
      %c0_32 = arith.constant 0 : index
      %c0_33 = arith.constant 0 : index
      %47 = vector.load %arg5[%c0_30, %c0_31, %c0_32, %c0_33] : memref<1x1x4x3xf32, #tpu.memory_space<vmem>>, vector<1x1x4x1xf32>
      %48 = vector.shape_cast %47 : vector<1x1x4x1xf32> to vector<4x1xf32>
      %49 = vector.shape_cast %46 : vector<4x1xf32> to vector<1x1x4x1xf32>
      tpu.vector_store %arg5[%c0_30, %c0_31, %c0_32, %c0_33], %49 {strides = array<i32>} : memref<1x1x4x3xf32, #tpu.memory_space<vmem>>, vector<1x1x4x1xf32>,
      %c0_34 = arith.constant 0 : index
      %c0_35 = arith.constant 0 : index
      %50 = vector.load %arg7[%c0_34, %c0_35] : memref<4x1xf32, #tpu.memory_space<vmem>>, vector<4x1xf32>
      %c0_36 = arith.constant 0 : index
      %c0_37 = arith.constant 0 : index
      %c0_38 = arith.constant 0 : index
      %c1 = arith.constant 1 : index
      %51 = vector.load %arg5[%c0_36, %c0_37, %c0_38, %c1] : memref<1x1x4x3xf32, #tpu.memory_space<vmem>>, vector<1x1x4x1xf32>
      %52 = vector.shape_cast %51 : vector<1x1x4x1xf32> to vector<4x1xf32>
      %53 = vector.shape_cast %50 : vector<4x1xf32> to vector<1x1x4x1xf32>
      tpu.vector_store %arg5[%c0_36, %c0_37, %c0_38, %c1], %53 {strides = array<i32>} : memref<1x1x4x3xf32, #tpu.memory_space<vmem>>, vector<1x1x4x1xf32>,
      %c0_39 = arith.constant 0 : index
      %c0_40 = arith.constant 0 : index
      %54 = vector.load %arg8[%c0_39, %c0_40] : memref<4x1xf32, #tpu.memory_space<vmem>>, vector<4x1xf32>
      %c0_41 = arith.constant 0 : index
      %c0_42 = arith.constant 0 : index
      %c0_43 = arith.constant 0 : index
      %c2 = arith.constant 2 : index
      %55 = vector.load %arg5[%c0_41, %c0_42, %c0_43, %c2] : memref<1x1x4x3xf32, #tpu.memory_space<vmem>>, vector<1x1x4x1xf32>
      %56 = vector.shape_cast %55 : vector<1x1x4x1xf32> to vector<4x1xf32>
      %57 = vector.shape_cast %54 : vector<4x1xf32> to vector<1x1x4x1xf32>
      tpu.vector_store %arg5[%c0_41, %c0_42, %c0_43, %c2], %57 {strides = array<i32>} : memref<1x1x4x3xf32, #tpu.memory_space<vmem>>, vector<1x1x4x1xf32>,
    } else {
    }
    return
  }
  func.func @transform_0(%arg0: i32, %arg1: i32, %arg2: i32) -> (i32, i32, i32) {
    %c1_i32 = arith.constant 1 : i32
    %0 = arith.muli %arg1, %c1_i32 : i32
    %1 = arith.addi %0, %arg2 : i32
    %c0_i32 = arith.constant 0 : i32
    %c0_i32_0 = arith.constant 0 : i32
    return %arg0, %c0_i32, %1 : i32, i32, i32
  }
  func.func @transform_1(%arg0: i32, %arg1: i32, %arg2: i32) -> (i32, i32, i32) {
    %c1_i32 = arith.constant 1 : i32
    %0 = arith.muli %arg1, %c1_i32 : i32
    %1 = arith.addi %0, %arg2 : i32
    %c0_i32 = arith.constant 0 : i32
    %c0_i32_0 = arith.constant 0 : i32
    return %arg0, %c0_i32, %1 : i32, i32, i32
  }
  func.func @transform_2(%arg0: i32, %arg1: i32, %arg2: i32) -> (i32, i32, i32, i32) {
    %c0_i32 = arith.constant 0 : i32
    %c0_i32_0 = arith.constant 0 : i32
    %c0_i32_1 = arith.constant 0 : i32
    return %arg0, %arg1, %c0_i32, %c0_i32_0 : i32, i32, i32, i32
  }
}

</mosaic_0001>

<llo_original>
// kernel: tvmf_dice_loss.1
$region0: #{tvmf_dice_loss.1}
  #allocation0 [shape = 'u32[]', space=smem, size = 0x4, offset = 0x4, fixed_abs, tag = 'smem constant byte address 0x4 - core index']
  #allocation1 [shape = 'u32[72,128]{1,0:T(1,128)}', space=vmem, size = 0x9000, scoped, tag = 'internal scratch']
  #allocation2 [shape = 'f32[4,1]{1,0:T(4,128)}', space=vmem, size = 0x800, scoped, tag = 'scratch operand']
  #allocation3 [shape = 'f32[4,1]{1,0:T(4,128)}', space=vmem, size = 0x800, scoped, tag = 'scratch operand']
  #allocation4 [shape = 'f32[4,1]{1,0:T(4,128)}', space=vmem, size = 0x800, scoped, tag = 'scratch operand']
  %s0 = inlined_call_operand.vmem [shape: f32[2,4,256], index: 0, kind: input, shape index: {}]
  %s1 = inlined_call_operand.vmem [shape: s32[2,1,256], index: 1, kind: input, shape index: {}]
  %s2 = inlined_call_operand.vmem [shape: f32[2,1,4,3], index: 2, kind: output, shape index: {}]
  %s3 = sld [smem:[#allocation0]]
  $region49: #{tvmf_dice_loss.1} parent=0
    _
  %s5 = ssub.s32 1, %s3
  %s6 = scalar_select 0, %s5, %s3
  loop: start=0, step=1, limit=4
  $region2: #{tvmf_dice_loss.1} parent=0 // loop_pre_header
    _
  $region3: #{tvmf_dice_loss.1} parent=0 // loop_header
    %s8 = sphi 0, %s12
    %p9 = scmp.ge.s32.totalorder %s8, 4
    %s15 = sphi 0, %s34
    %s16 = sphi 0, %s30
    %s17 = sphi 0, %s26
    %s18 = sphi 0, %s15
    %s19 = sphi 0, %s16
    %s20 = sphi 0, %s17
    %s21 = sphi 0, %s18
    %s22 = sphi 0, %s19
    %s23 = sphi 0, %s20
    %s41 = sphi 0, %s43
    %s44 = sphi 0, %s41
    %s45 = sphi 0, %s44
    %s61 = sphi 0, %s45
    %s71 = sphi 0, %s73
    %s74 = sphi 0, %s71
    %s75 = sphi 0, %s74
    %s91 = sphi 0, %s75
    %s99 = sphi 0, %s101
    %s102 = sphi 0, %s99
    %s103 = sphi 0, %s102
    %s119 = sphi 0, %s103
  $region4: #{tvmf_dice_loss.1} parent=0 // loop_header_branch
    %11 = sbr.rel (%p9) target = $region8
  $region5: #{tvmf_dice_loss.1} parent=0 // loop_body
    %s13 = ssub.s32 %s8, 1
    %s14 = ssub.s32 %s8, 2
    %s24 = sadd.s32 1, %s17
    %p25 = scmp.ge.s32.totalorder %s24, 1
    %s26 = scalar_select %p25, 0, %s24
    %s27 = sadd.s32 1, %s16
    %s28 = scalar_select %p25, %s27, %s16
    %p29 = scmp.ge.s32.totalorder %s28, 1
    %s30 = scalar_select %p29, 0, %s28
    %s31 = sadd.s32 1, %s15
    %s32 = scalar_select %p29, %s31, %s15
    %p33 = scmp.ge.s32.totalorder %s32, 2
    %s34 = scalar_select %p33, 0, %s32
    %s35 = sadd.s32 %s16, %s17
    %s36 = sadd.s32 %s30, %s26
    %s37 = ssub.s32 %s15, %s34
    %s38 = ssub.s32 %s35, %s36
    %s39 = sor.u32 %s37, %s38
    %p40 = scmp.eq.s32.totalorder %s39, 0
    %s42 = sadd.s32 %s41, 1
    %s43 = scalar_select %p40, %s41, %s42
    %p46 = pneg %p40
    %p47 = scmp.eq.s32.totalorder %s8, 1
    %p48 = por %p46, %p47
    %p49 = scmp.ne.s32.totalorder %s41, %s44
    %p50 = scmp.eq.s32.totalorder %s8, 0
    %p51 = por %p49, %p50
    %p52 = scmp.ne.s32.totalorder %s41, %s44
    %p53 = scmp.eq.s32.totalorder %s13, 1
    %p54 = por %p52, %p53
    %p55 = scmp.ne.s32.totalorder %s44, %s45
    %p56 = scmp.eq.s32.totalorder %s13, 0
    %p57 = por %p55, %p56
    %p58 = scmp.ne.s32.totalorder %s44, %s45
    %p59 = scmp.eq.s32.totalorder %s14, 1
    %p60 = por %p58, %p59
    %p62 = scmp.ne.s32.totalorder %s45, %s61
    %p63 = scmp.eq.s32.totalorder %s14, 0
    %p64 = por %p62, %p63
    %s65 = sadd.s32 %s16, %s17
    %s66 = sadd.s32 %s30, %s26
    %s67 = ssub.s32 %s15, %s34
    %s68 = ssub.s32 %s65, %s66
    %s69 = sor.u32 %s67, %s68
    %p70 = scmp.eq.s32.totalorder %s69, 0
    %s72 = sadd.s32 %s71, 1
    %s73 = scalar_select %p70, %s71, %s72
    %p76 = pneg %p70
    %p77 = scmp.eq.s32.totalorder %s8, 1
    %p78 = por %p76, %p77
    %p79 = scmp.ne.s32.totalorder %s71, %s74
    %p80 = scmp.eq.s32.totalorder %s8, 0
    %p81 = por %p79, %p80
    %p82 = scmp.ne.s32.totalorder %s71, %s74
    %p83 = scmp.eq.s32.totalorder %s13, 1
    %p84 = por %p82, %p83
    %p85 = scmp.ne.s32.totalorder %s74, %s75
    %p86 = scmp.eq.s32.totalorder %s13, 0
    %p87 = por %p85, %p86
    %p88 = scmp.ne.s32.totalorder %s74, %s75
    %p89 = scmp.eq.s32.totalorder %s14, 1
    %p90 = por %p88, %p89
    %p92 = scmp.ne.s32.totalorder %s75, %s91
    %p93 = scmp.eq.s32.totalorder %s14, 0
    %p94 = por %p92, %p93
    %s95 = ssub.s32 %s15, %s34
    %s96 = ssub.s32 %s16, %s30
    %s97 = sor.u32 %s95, %s96
    %p98 = scmp.eq.s32.totalorder %s97, 0
    %s100 = sadd.s32 %s99, 1
    %s101 = scalar_select %p98, %s99, %s100
    %p104 = pneg %p98
    %p105 = scmp.eq.s32.totalorder %s8, 1
    %p106 = por %p104, %p105
    %p107 = scmp.ne.s32.totalorder %s99, %s102
    %p108 = scmp.eq.s32.totalorder %s8, 0
    %p109 = por %p107, %p108
    %p110 = scmp.ne.s32.totalorder %s99, %s102
    %p111 = scmp.eq.s32.totalorder %s13, 1
    %p112 = por %p110, %p111
    %p113 = scmp.ne.s32.totalorder %s102, %s103
    %p114 = scmp.eq.s32.totalorder %s13, 0
    %p115 = por %p113, %p114
    %p116 = scmp.ne.s32.totalorder %s102, %s103
    %p117 = scmp.eq.s32.totalorder %s14, 1
    %p118 = por %p116, %p117
    %p120 = scmp.ne.s32.totalorder %s103, %s119
    %p121 = scmp.eq.s32.totalorder %s14, 0
    %p122 = por %p120, %p121
    %p123 = scmp.le.s32.totalorder 1, %s8
    %p124 = scmp.lt.s32.totalorder %s8, 3
    %p125 = pnand %p123, %p124
    %p126 = pneg %p125
    // Predicated region
    $region9: #{tvmf_dice_loss.1} parent=5 // pred_check
      _
    $region10: #{tvmf_dice_loss.1} parent=5 // pred_check_branch
      %128 = sbr.rel (%p125) target = $region12
    $region11: #{tvmf_dice_loss.1} parent=5 // pred_region
      %s129 = ssub.s32 %s8, 1
    $region12: #{tvmf_dice_loss.1} parent=5 // pred_fallthru
      _
    %p130 = scmp.lt.s32.totalorder %s8, 2
    // Predicated region
    $region13: #{tvmf_dice_loss.1} parent=5 // pred_check
      %p131 = pneg %p130
    $region14: #{tvmf_dice_loss.1} parent=5 // pred_check_branch
      %133 = sbr.rel (%p131) target = $region16
    $region15: #{tvmf_dice_loss.1} parent=5 // pred_region
      // Predicated region
      $region17: #{tvmf_dice_loss.1} parent=15 // pred_check
        %p134 = pneg %p51
      $region18: #{tvmf_dice_loss.1} parent=15 // pred_check_branch
        %136 = sbr.rel (%p134) target = $region20
      $region19: #{tvmf_dice_loss.1} parent=15 // pred_region
        %s137 = sadd.s32 %s16, %s17
        %s138 = smul.u32 2, %s137
        %p139 = scmp.lt.s32.totalorder %s15, 1
        %s140 = scalar_select %p139, %s15, 1
        %p141 = scmp.lt.s32.totalorder %s138, 1
        %s142 = scalar_select %p141, %s138, 1
        %s143 = smul.addr %s140, 2
        %s144 = sadd.s32 %s142, %s143
        %s145 = smul.addr %s144, 4
        %s146 = scalar_lea.vmem %s0, %s145
        %s147 = sadd.s32 %s16, %s17
        %s148 = smul.u32 2, %s147
      $region20: #{tvmf_dice_loss.1} parent=15 // pred_fallthru
        _
      // Predicated region
      $region21: #{tvmf_dice_loss.1} parent=15 // pred_check
        %p149 = pneg %p81
      $region22: #{tvmf_dice_loss.1} parent=15 // pred_check_branch
        %151 = sbr.rel (%p149) target = $region24
      $region23: #{tvmf_dice_loss.1} parent=15 // pred_region
        %s152 = sadd.s32 %s16, %s17
        %s153 = smul.u32 2, %s152
        %p154 = scmp.lt.s32.totalorder %s15, 1
        %s155 = scalar_select %p154, %s15, 1
        %p156 = scmp.lt.s32.totalorder %s153, 1
        %s157 = scalar_select %p156, %s153, 1
        %s158 = smul.addr %s155, 2
        %s159 = sadd.s32 %s157, %s158
        %s160 = scalar_lea.vmem %s1, %s159
        %s161 = sadd.s32 %s16, %s17
        %s162 = smul.u32 2, %s161
      $region24: #{tvmf_dice_loss.1} parent=15 // pred_fallthru
        _
    $region16: #{tvmf_dice_loss.1} parent=5 // pred_fallthru
      _
    %p163 = scmp.le.s32.totalorder 1, %s8
    %p164 = scmp.lt.s32.totalorder %s8, 3
    %p165 = pnand %p163, %p164
    %p166 = pneg %p165
    // Predicated region
    $region25: #{tvmf_dice_loss.1} parent=5 // pred_check
      _
    $region26: #{tvmf_dice_loss.1} parent=5 // pred_check_branch
      %168 = sbr.rel (%p165) target = $region28
    $region27: #{tvmf_dice_loss.1} parent=5 // pred_region
      %s169 = ssub.s32 %s8, 1
      %s170 = sadd.s32 %s19, %s20
      %s171 = smul.u32 2, %s170
      %p172 = scmp.lt.s32.totalorder %s18, 1
      %s173 = scalar_select %p172, %s18, 1
      %p174 = scmp.lt.s32.totalorder %s171, 1
      %s175 = scalar_select %p174, %s171, 1
      %s176 = smul.addr %s173, 2
      %s177 = sadd.s32 %s175, %s176
      %s178 = smul.addr %s177, 4
      %s179 = scalar_lea.vmem %s0, %s178
      %p180 = pneg %p57
      %p181 = pneg %p54
      %s182 = sadd.s32 %s19, %s20
      %s183 = smul.u32 2, %s182
      %p184 = scmp.lt.s32.totalorder %s18, 1
      %s185 = scalar_select %p184, %s18, 1
      %p186 = scmp.lt.s32.totalorder %s183, 1
      %s187 = scalar_select %p186, %s183, 1
      %s188 = smul.addr %s185, 2
      %s189 = sadd.s32 %s187, %s188
      %s190 = scalar_lea.vmem %s1, %s189
      %p191 = pneg %p87
      %p192 = pneg %p84
      %p193 = pneg %p115
      %p194 = pneg %p112
      %p195 = scmp.lt.s32.totalorder %s18, 1
      %s196 = scalar_select %p195, %s18, 1
      %p197 = scmp.lt.s32.totalorder %s19, 0
      %s198 = scalar_select %p197, %s19, 0
      %s199 = sadd.s32 %s198, %s196
      %s200 = smul.addr %s199, 4
      %s201 = scalar_lea.vmem %s2, %s200
      %s202 = sadd.s32 %s19, %s20
      %s203 = smul.u32 2, %s202
      %p204 = scmp.lt.s32.totalorder %s18, 1
      %s205 = scalar_select %p204, %s18, 1
      %p206 = scmp.lt.s32.totalorder %s203, 1
      %s207 = scalar_select %p206, %s203, 1
      %s208 = smul.addr %s205, 2
      %s209 = sadd.s32 %s207, %s208
      %s210 = smul.addr %s209, 4
      %s211 = scalar_lea.vmem %s0, %s210
      %s212 = sadd.s32 %s19, %s20
      %s213 = smul.u32 2, %s212
      %s214 = sadd.s32 %s19, %s20
      %s215 = smul.u32 2, %s214
      %p216 = scmp.lt.s32.totalorder %s18, 1
      %s217 = scalar_select %p216, %s18, 1
      %p218 = scmp.lt.s32.totalorder %s215, 1
      %s219 = scalar_select %p218, %s215, 1
      %s220 = smul.addr %s217, 2
      %s221 = sadd.s32 %s219, %s220
      %s222 = scalar_lea.vmem %s1, %s221
      %s223 = sadd.s32 %s19, %s20
      %s224 = smul.u32 2, %s223
      %p225 = scmp.lt.s32.totalorder %s18, 1
      %s226 = scalar_select %p225, %s18, 1
      %p227 = scmp.lt.s32.totalorder %s19, 0
      %s228 = scalar_select %p227, %s19, 0
      %s229 = sadd.s32 %s228, %s226
      %s230 = smul.addr %s229, 4
      %s231 = scalar_lea.vmem %s2, %s230
      %p232 = scmp.eq.s32.totalorder %s20, 0
      // Predicated region
      $region29: #{tvmf_dice_loss.1} parent=27 // pred_check
        %p233 = pneg %p232
      $region30: #{tvmf_dice_loss.1} parent=27 // pred_check_branch
        %235 = sbr.rel (%p233) target = $region32
      $region31: #{tvmf_dice_loss.1} parent=27 // pred_region
        %vm236 = vcmask 3072
        %237 = vst.msk [vmem:[#allocation2] sm:$0xf] %vm236, 0.0
        %238 = vst.msk [vmem:[#allocation3] sm:$0xf] %vm236, 0.0
        %239 = vst.msk [vmem:[#allocation4] sm:$0xf] %vm236, 0.0
      $region32: #{tvmf_dice_loss.1} parent=27 // pred_fallthru
        _
      %v240 = vld [vmem:[%s211] sm:$0xff]
      %v241 = vld [vmem:[%s222] sm:$0x3]
      %243 = vst [vmem:[#allocation1] ss:$2 sm:$0xff] %v240
      %v244 = vld.sshfl [vmem:[#allocation1] sm:$0xff pattern:$0x75316420]
      %v245 = vld.sshfl [vmem:[#allocation1 + $0x8] sm:$0xff pattern:$0x75316420]
      %vm248 = vcmask 1043456
      %v249 = vsel %vm248, %v244, -inf
      %v250 = vrot.slane %v249, 4
      %v251 = vmax.f32 %v249, %v250
      %v252 = vrot.slane %v251, 2
      %v253 = vmax.f32 %v251, %v252
      %v254 = vrot.slane %v253, 1
      %v255 = vmax.f32 %v253, %v254
      %v256 = vsel %vm248, %v245, -inf
      %v257 = vrot.slane %v256, 4
      %v258 = vmax.f32 %v256, %v257
      %v259 = vrot.slane %v258, 2
      %v260 = vmax.f32 %v258, %v259
      %v261 = vrot.slane %v260, 1
      %v262 = vmax.f32 %v260, %v261
      %v265 = vrot.slane %v262, 4
      %v266 = vsel %vm248, %v255, %v265
      %v268 = vsub.f32 %v240, %v266
      %v269 = vmul.f32 %v268, 1.442695
      %v270 = vpow.pop %v269
      %272 = vst [vmem:[#allocation1] ss:$2 sm:$0xff] %v270
      %v273 = vld.sshfl [vmem:[#allocation1] sm:$0xff pattern:$0x75316420]
      %v274 = vld.sshfl [vmem:[#allocation1 + $0x8] sm:$0xff pattern:$0x75316420]
      %v277 = vsel %vm248, %v273, 0.0
      %v278 = vrot.slane %v277, 4
      %v279 = vadd.f32 %v277, %v278
      %v280 = vrot.slane %v279, 2
      %v281 = vadd.f32 %v279, %v280
      %v282 = vrot.slane %v281, 1
      %v283 = vadd.f32 %v281, %v282
      %v284 = vsel %vm248, %v274, 0.0
      %v285 = vrot.slane %v284, 4
      %v286 = vadd.f32 %v284, %v285
      %v287 = vrot.slane %v286, 2
      %v288 = vadd.f32 %v286, %v287
      %v289 = vrot.slane %v288, 1
      %v290 = vadd.f32 %v288, %v289
      %v291 = vrcp.pop %v283
      %v292 = vmul.f32 %v283, %v291
      %v293 = vsub.f32 1.0, %v292
      %v294 = vmul.f32 %v291, %v293
      %v295 = vadd.f32 %v291, %v294
      %vm296 = vweird.f32 %v283
      %vm297 = vweird.f32 %v291
      %vm298 = vmor %vm296, %vm297
      %v299 = vsel %vm298, %v291, %v295
      %v300 = vand.u32 2147483647, %v283
      %vm301 = vcmp.eq.f32.partialorder %v300, 8.507059e+37
      %v302 = vand.u32 %v283, 2147483648
      %v303 = vor.u32 1.1754944e-38, %v302
      %v304 = vsel %vm301, %v303, %v299
      %v305 = vmul.f32 1.0, %v304
      %v306 = vrcp.pop %v290
      %v307 = vmul.f32 %v290, %v306
      %v308 = vsub.f32 1.0, %v307
      %v309 = vmul.f32 %v306, %v308
      %v310 = vadd.f32 %v306, %v309
      %vm311 = vweird.f32 %v290
      %vm312 = vweird.f32 %v306
      %vm313 = vmor %vm311, %vm312
      %v314 = vsel %vm313, %v306, %v310
      %v315 = vand.u32 2147483647, %v290
      %vm316 = vcmp.eq.f32.partialorder %v315, 8.507059e+37
      %v317 = vand.u32 %v290, 2147483648
      %v318 = vor.u32 1.1754944e-38, %v317
      %v319 = vsel %vm316, %v318, %v314
      %v320 = vmul.f32 1.0, %v319
      %v323 = vrot.slane %v320, 4
      %v324 = vsel %vm248, %v305, %v323
      %v326 = vmul.f32 %v270, %v324
      %v327 = vlaneseq
      %v328 = vshrl.u32 %v327, 7
      %v329 = vperm.slane %v241, 0
      %v330 = vperm.slane %v241, 1
      %vm331 = vcmp.eq.s32.totalorder %v329, %v328
      %vm332 = vcmp.eq.s32.totalorder %v330, %v328
      %v333 = vld [vmem:[#allocation2] sm:$0xf]
      %335 = vst [vmem:[#allocation1] ss:$2 sm:$0xff] %v326
      %v336 = vld.sshfl [vmem:[#allocation1] sm:$0xff pattern:$0x75316420]
      %v337 = vld.sshfl [vmem:[#allocation1 + $0x8] sm:$0xff pattern:$0x75316420]
      %v340 = vsel %vm331, %v336, 0.0
      %v341 = vsel %vm332, %v337, 0.0
      %v342 = vsel %vm248, %v340, 0.0
      %v343 = vsel %vm248, %v341, 0.0
      %v344 = vadd.f32 %v342, %v343
      %345 = vadd.xlane.f32.xlu0 %v344
      %v346 = vpop.xlane.xlu0 %345
      %v347 = vadd.f32 %v333, %v346
      %vm348 = vcmask 3072
      %349 = vst.msk [vmem:[#allocation2] sm:$0xf] %vm348, %v347
      %v350 = vld [vmem:[#allocation3] sm:$0xf]
      %v351 = vmul.f32 %v326, %v326
      %353 = vst [vmem:[#allocation1] ss:$2 sm:$0xff] %v351
      %v354 = vld.sshfl [vmem:[#allocation1] sm:$0xff pattern:$0x75316420]
      %v355 = vld.sshfl [vmem:[#allocation1 + $0x8] sm:$0xff pattern:$0x75316420]
      %v358 = vsel %vm248, %v354, 0.0
      %v359 = vsel %vm248, %v355, 0.0
      %v360 = vadd.f32 %v358, %v359
      %361 = vadd.xlane.f32.xlu0 %v360
      %v362 = vpop.xlane.xlu0 %361
      %v363 = vadd.f32 %v350, %v362
      %364 = vst.msk [vmem:[#allocation3] sm:$0xf] %vm348, %v363
      %v365 = vld [vmem:[#allocation4] sm:$0xf]
      %v366 = vsel %vm331, 1.0, 0.0
      %v367 = vsel %vm332, 1.0, 0.0
      %v368 = vsel %vm248, %v366, 0.0
      %v369 = vsel %vm248, %v367, 0.0
      %v370 = vadd.f32 %v368, %v369
      %371 = vadd.xlane.f32.xlu0 %v370
      %v372 = vpop.xlane.xlu0 %371
      %v373 = vadd.f32 %v365, %v372
      %374 = vst.msk [vmem:[#allocation4] sm:$0xf] %vm348, %v373
      // Predicated region
      $region33: #{tvmf_dice_loss.1} parent=27 // pred_check
        %p375 = pneg %p232
      $region34: #{tvmf_dice_loss.1} parent=27 // pred_check_branch
        %377 = sbr.rel (%p375) target = $region36
      $region35: #{tvmf_dice_loss.1} parent=27 // pred_region
        %v378 = vld [vmem:[#allocation2] sm:$0xf]
        %379 = vst.msk [vmem:[%s231] sm:$0xf] %vm348, %v378
        %v380 = vld [vmem:[#allocation3] sm:$0xf]
        %382 = vrot.lane.b32.xlu0 %v380, 1
        %v383 = vpop.permute.xlu0 %382
        %vm385 = vcmask 11272
        %386 = vst.msk [vmem:[%s231] sm:$0xf] %vm385, %v383
        %v387 = vld [vmem:[#allocation4] sm:$0xf]
        %389 = vrot.lane.b32.xlu0 %v387, 2
        %v390 = vpop.permute.xlu0 %389
        %vm392 = vcmask 19472
        %393 = vst.msk [vmem:[%s231] sm:$0xf] %vm392, %v390
      $region36: #{tvmf_dice_loss.1} parent=27 // pred_fallthru
        _
      %p394 = scmp.lt.s32.totalorder %s18, 1
      %s395 = scalar_select %p394, %s18, 1
      %p396 = scmp.lt.s32.totalorder %s19, 0
      %s397 = scalar_select %p396, %s19, 0
      %s398 = sadd.s32 %s397, %s395
      %s399 = smul.addr %s398, 4
      %s400 = scalar_lea.vmem %s2, %s399
      // Predicated region
      $region37: #{tvmf_dice_loss.1} parent=27 // pred_check
        %p401 = pneg %p112
      $region38: #{tvmf_dice_loss.1} parent=27 // pred_check_branch
        %403 = sbr.rel (%p401) target = $region40
      $region39: #{tvmf_dice_loss.1} parent=27 // pred_region
        _
      $region40: #{tvmf_dice_loss.1} parent=27 // pred_fallthru
        _
    $region28: #{tvmf_dice_loss.1} parent=5 // pred_fallthru
      _
    %p404 = scmp.le.s32.totalorder 2, %s8
    // Predicated region
    $region41: #{tvmf_dice_loss.1} parent=5 // pred_check
      %p405 = pneg %p404
    $region42: #{tvmf_dice_loss.1} parent=5 // pred_check_branch
      %407 = sbr.rel (%p405) target = $region44
    $region43: #{tvmf_dice_loss.1} parent=5 // pred_region
      %s408 = ssub.s32 %s8, 2
      // Predicated region
      $region45: #{tvmf_dice_loss.1} parent=43 // pred_check
        %p409 = pneg %p118
      $region46: #{tvmf_dice_loss.1} parent=43 // pred_check_branch
        %411 = sbr.rel (%p409) target = $region48
      $region47: #{tvmf_dice_loss.1} parent=43 // pred_region
        %p412 = scmp.lt.s32.totalorder %s21, 1
        %s413 = scalar_select %p412, %s21, 1
        %p414 = scmp.lt.s32.totalorder %s22, 0
        %s415 = scalar_select %p414, %s22, 0
        %s416 = sadd.s32 %s415, %s413
        %s417 = smul.addr %s416, 4
        %s418 = scalar_lea.vmem %s2, %s417
      $region48: #{tvmf_dice_loss.1} parent=43 // pred_fallthru
        _
    $region44: #{tvmf_dice_loss.1} parent=5 // pred_fallthru
      _
  $region6: #{tvmf_dice_loss.1} parent=0 // loop_footer
    %s12 = sadd.s32 1, %s8
  $region7: #{tvmf_dice_loss.1} parent=0 // loop_footer_branch
    %7 = sbr.rel target = $region3
  $region8: #{tvmf_dice_loss.1} parent=0 // loop_exit
    _

</llo_original>
